<compile_context>
chip_gen: v7x
topology: tpu7x:2x2x1
jax: 0.10.0
libtpu: 0.0.40
codegen_flags: <defaults>
</compile_context>

<pallas_src>
import functools

import jax
import jax.numpy as jnp
from jax.experimental import pallas as pl
from jax.experimental.pallas import tpu as pltpu


def _round_up(x, m):
    return ((x + m - 1) // m) * m


def _hw_config():
    """Returns (max_tile_b, max_tile_n, vmem_limit_bytes), generation-aware."""
    vmem_bytes = 0
    try:
        vmem_bytes = int(pltpu.get_tpu_info().vmem_capacity_bytes)
    except Exception:
        vmem_bytes = 0  # unknown chip / API mismatch -> conservative defaults
    if vmem_bytes >= 100 * 1024 * 1024:
        # v5e / v6e: 128 MiB physical VMEM. 512x4096 f32 y + bf16 design is
        # ~32 MiB double-buffered; amortizes the ~0.35us/step pipeline overhead.
        return 512, 4096, 96 * 1024 * 1024
    # v7x (64 MiB physical VMEM) or unknown: keep the double-buffered footprint
    # ~16 MiB and leave headroom for accumulators / Mosaic internal scratch.
    return 256, 4096, 40 * 1024 * 1024


def _select_tiles(B, N, max_tb, max_tn):
    # Batch tile: aim for >=2 batch tiles so the "parallel" axis can shard across
    # v7x's two TensorCores (near-neutral on single-TC v5e/v6e).
    if B <= 8:
        tile_b = B                                   # == full dim, always legal
    else:
        tile_b = min(max_tb, _round_up(pl.cdiv(B, 2), 8))
    # Observation (reduction) tile: full dim when it fits (single N step), else a
    # 128-aligned tile; any tail is masked in-kernel.
    tile_n = N if N <= max_tn else max_tn
    return tile_b, tile_n


def _general_kernel(y_ref, lp_ref, d_ref, p_ref, out_ref,
                    s_acc, ss_acc, ln_acc, *, n_total, tile_n, need_n_mask):
    # General 2-column design.
    # y_ref:   (TB, TN) f32      observations (batch on sublanes, obs on lanes)
    # lp_ref:  (TB, 1)  f32      trace log_prob
    # d_ref:   (2, TB, TN) bf16  design, group-major contiguous layout
    # p_ref:   (8,) f32 SMEM     [w1_0, w1_1, w1_2, b1, w2_0, w2_1, w2_2, b2]
    # out_ref: (TB, 1)  f32
    # s_acc / ss_acc / ln_acc: (2, TB, 1) f32 VMEM accumulators over the N axis
    k = pl.program_id(1)

    @pl.when(k == 0)
    def _init():
        s_acc[...] = jnp.zeros_like(s_acc)
        ss_acc[...] = jnp.zeros_like(ss_acc)
        ln_acc[...] = jnp.zeros_like(ln_acc)

    y = y_ref[...]
    if need_n_mask:
        # Zero the out-of-bounds lanes of the last N tile (replaces jnp.pad).
        col = jax.lax.broadcasted_iota(jnp.int32, y.shape, 1) + k * tile_n
        valid = col < n_total
        y = jnp.where(valid, y, 0.0)
    y2 = y * y
    for g in range(2):                             # static unroll over the 2 groups
        d = d_ref[g].astype(jnp.float32)           # upcast narrowed design pre-VPU
        if need_n_mask:
            d = jnp.where(valid, d, 0.0)
        s_acc[g] += jnp.sum(y * d, axis=-1, keepdims=True)    # group_sums
        ss_acc[g] += jnp.sum(y2 * d, axis=-1, keepdims=True)  # group_square_sums
        ln_acc[g] += jnp.sum(d, axis=-1, keepdims=True)       # design_lengths

    @pl.when(k == pl.num_programs(1) - 1)
    def _finalize():
        acc = lp_ref[...]
        for g in range(2):
            w0 = p_ref[4 * g + 0]
            w1 = p_ref[4 * g + 1]
            w2 = p_ref[4 * g + 2]
            bg = p_ref[4 * g + 3]
            s = s_acc[g]
            s2 = s * s                 # group_sum_squares
            rw = s2 * ln_acc[g]        # reweighted_group_sum_squares
            acc = acc - (ss_acc[g] * w0 + s2 * w1 + rw * w2 + bg)
        out_ref[...] = acc


def _complementary_kernel(y_ref, lp_ref, d0_ref, p_ref, out_ref,
                          s0_acc, ss0_acc, ln0_acc, sy_acc, sy2_acc,
                          *, n_total, tile_n, need_n_mask):
    # Specialized path, valid ONLY when design[...,1] == 1 - design[...,0].
    # Streams a single (TB, TN) design slab; group-1 stats derived by subtraction.
    k = pl.program_id(1)

    @pl.when(k == 0)
    def _init():
        for acc in (s0_acc, ss0_acc, ln0_acc, sy_acc, sy2_acc):
            acc[...] = jnp.zeros_like(acc)

    y = y_ref[...]
    d0 = d0_ref[...].astype(jnp.float32)
    if need_n_mask:
        col = jax.lax.broadcasted_iota(jnp.int32, y.shape, 1) + k * tile_n
        valid = col < n_total
        y = jnp.where(valid, y, 0.0)
        d0 = jnp.where(valid, d0, 0.0)
    y2 = y * y
    s0_acc[...] += jnp.sum(y * d0, axis=-1, keepdims=True)
    ss0_acc[...] += jnp.sum(y2 * d0, axis=-1, keepdims=True)
    ln0_acc[...] += jnp.sum(d0, axis=-1, keepdims=True)
    sy_acc[...] += jnp.sum(y, axis=-1, keepdims=True)
    sy2_acc[...] += jnp.sum(y2, axis=-1, keepdims=True)

    @pl.when(k == pl.num_programs(1) - 1)
    def _finalize():
        s = (s0_acc[...], sy_acc[...] - s0_acc[...])
        ss = (ss0_acc[...], sy2_acc[...] - ss0_acc[...])
        ln = (ln0_acc[...], float(n_total) - ln0_acc[...])  # true (unpadded) N
        acc = lp_ref[...]
        for g in range(2):
            w0 = p_ref[4 * g + 0]
            w1 = p_ref[4 * g + 1]
            w2 = p_ref[4 * g + 2]
            bg = p_ref[4 * g + 3]
            s2 = s[g] * s[g]
            rw = s2 * ln[g]
            acc = acc - (ss[g] * w0 + s2 * w1 + rw * w2 + bg)
        out_ref[...] = acc


def pack_design(design, dtype=jnp.bfloat16):
    """(B, N, 2) -> contiguous group-major (2, B, N), narrowed to `dtype`.

    Done once outside the hot path: each group slab becomes one clean lane-major
    DMA, and bf16 halves the design's HBM bytes (exact for 0/1 / small-integer
    designs; pass dtype=jnp.float32 for general real-valued designs)."""
    return jnp.transpose(design, (2, 0, 1)).astype(dtype)


def pack_design_complementary(design, dtype=jnp.bfloat16):
    """(B, N, 2) -> (B, N): the group-0 column only.

    Valid ONLY when design[..., 1] == 1 - design[..., 0] (the OED assignment
    setup); the kernel then never reads the second slab at all."""
    return design[..., 0].astype(dtype)


def t_specialized_forward(design_packed, y, lp, w, b):
    """T_specialized forward pass.

    design_packed: (2, B, N) from pack_design()                (general design) or
                   (B, N)    from pack_design_complementary()  (complementary design)
    y: (B, N) observations, lp: (B,) trace log_prob,
    w: (2, 3) group1/group2 Linear weights, b: (2,) biases.  Returns (B,) f32.
    """
    complementary = design_packed.ndim == 2
    if complementary:
        B, N = design_packed.shape
    else:
        P, B, N = design_packed.shape
        assert P == 2, "T_specialized uses exactly 2 groups"
    assert y.shape == (B, N)

    y = y.astype(jnp.float32)
    lp2 = lp.astype(jnp.float32).reshape(B, 1)
    # Flat (8,) SMEM parameter vector: [w1, b1, w2, b2]
    params = jnp.concatenate([w[0], b[0:1], w[1], b[1:2]]).astype(jnp.float32)

    max_tb, max_tn, vmem_limit = _hw_config()
    tile_b, tile_n = _select_tiles(B, N, max_tb, max_tn)
    grid = (pl.cdiv(B, tile_b), pl.cdiv(N, tile_n))
    need_n_mask = (N % tile_n) != 0  # in-kernel tail masking replaces jnp.pad

    y_spec = pl.BlockSpec((tile_b, tile_n), lambda i, k: (i, k))
    lp_spec = pl.BlockSpec((tile_b, 1), lambda i, k: (i, 0))
    smem_spec = pl.BlockSpec(memory_space=pltpu.MemorySpace.SMEM)
    out_spec = pl.BlockSpec((tile_b, 1), lambda i, k: (i, 0))

    if complementary:
        kernel = functools.partial(_complementary_kernel, n_total=N,
                                   tile_n=tile_n, need_n_mask=need_n_mask)
        d_spec = pl.BlockSpec((tile_b, tile_n), lambda i, k: (i, k))
        scratch = [pltpu.VMEM((tile_b, 1), jnp.float32)] * 5
    else:
        kernel = functools.partial(_general_kernel, n_total=N,
                                   tile_n=tile_n, need_n_mask=need_n_mask)
        d_spec = pl.BlockSpec((2, tile_b, tile_n), lambda i, k: (0, i, k))
        scratch = [pltpu.VMEM((2, tile_b, 1), jnp.float32)] * 3

    out = pl.pallas_call(
        kernel,
        out_shape=jax.ShapeDtypeStruct((B, 1), jnp.float32),
        grid_spec=pltpu.PrefetchScalarGridSpec(
            num_scalar_prefetch=0,
            grid=grid,
            in_specs=[y_spec, lp_spec, d_spec, smem_spec],
            out_specs=out_spec,
            scratch_shapes=scratch,
        ),
        compiler_params=pltpu.CompilerParams(
            dimension_semantics=("parallel", "arbitrary"),
            vmem_limit_bytes=vmem_limit,
        ),
    )(y, lp2, design_packed, params)
    return out[:, 0]


def t_specialized_reference(design, y, lp, w, b):
    design_lengths = design.sum(-2)                                  # (B, P)
    group_sums = jnp.einsum("bn,bnp->bp", y, design)                 # (B, P)
    group_square_sums = jnp.einsum("bn,bnp->bp", y * y, design)      # (B, P)
    group_sum_squares = group_sums ** 2
    reweighted = group_sum_squares * design_lengths
    feats = jnp.stack([group_square_sums, group_sum_squares, reweighted], axis=-1)
    grp1 = feats[:, 0, :] @ w[0] + b[0]
    grp2 = feats[:, 1, :] @ w[1] + b[1]
    return lp - grp1 - grp2


if __name__ == "__main__":
    key = jax.random.PRNGKey(0)
    k_design, k_y, k_lp, k_w, k_b, k_big = jax.random.split(key, 6)

    # --- small shapes (like the OED setup): single-tile path -------------------
    B, N = 4, 16
    assign = jax.random.bernoulli(k_design, 0.5, (B, N)).astype(jnp.float32)
    design = jnp.stack([assign, 1.0 - assign], axis=-1)              # (B, N, 2)
    y = jax.random.normal(k_y, (B, N), dtype=jnp.float32)            # observations
    lp = jax.random.normal(k_lp, (B,), dtype=jnp.float32)            # trace log_prob
    # TODO(synk): trace.compute_log_prob() has no Pallas equivalent; lp is taken as an input.

    # nn.Linear(3, 1) params for group1 / group2 (PyTorch-style uniform init)
    bound = 1.0 / jnp.sqrt(3.0)
    w = jax.random.uniform(k_w, (2, 3), minval=-bound, maxval=bound, dtype=jnp.float32)
    b = jax.random.uniform(k_b, (2,), minval=-bound, maxval=bound, dtype=jnp.float32)

    ref = t_specialized_reference(design, y, lp, w, b)

    out_gen = t_specialized_forward(pack_design(design), y, lp, w, b)
    jax.block_until_ready(out_gen)
    assert out_gen.shape == (B,)
    assert jnp.allclose(out_gen, ref, rtol=2e-4, atol=1e-2), (out_gen, ref)

    out_cmp = t_specialized_forward(pack_design_complementary(design), y, lp, w, b)
    jax.block_until_ready(out_cmp)
    assert jnp.allclose(out_cmp, ref, rtol=2e-4, atol=1e-2), (out_cmp, ref)

    # --- larger shapes: exercises multi-tile grid, batch/N tails, in-kernel mask -
    kd2, ky2, kl2, kw2, kb2 = jax.random.split(k_big, 5)
    B2, N2 = 20, 5000
    assign2 = jax.random.bernoulli(kd2, 0.5, (B2, N2)).astype(jnp.float32)
    design2 = jnp.stack([assign2, 1.0 - assign2], axis=-1)
    y2 = jax.random.normal(ky2, (B2, N2), dtype=jnp.float32)
    lp2 = jax.random.normal(kl2, (B2,), dtype=jnp.float32)
    w2 = jnp.abs(jax.random.uniform(kw2, (2, 3), minval=-bound, maxval=bound,
                                    dtype=jnp.float32))
    b2 = jax.random.uniform(kb2, (2,), minval=-bound, maxval=bound, dtype=jnp.float32)

    ref2 = t_specialized_reference(design2, y2, lp2, w2, b2)
    out2_gen = t_specialized_forward(pack_design(design2), y2, lp2, w2, b2)
    jax.block_until_ready(out2_gen)
    out2_cmp = t_specialized_forward(pack_design_complementary(design2), y2, lp2, w2, b2)
    jax.block_until_ready(out2_cmp)
    assert jnp.allclose(out2_gen, ref2, rtol=2e-4, atol=1e-2), (out2_gen, ref2)
    assert jnp.allclose(out2_cmp, ref2, rtol=2e-4, atol=1e-2), (out2_cmp, ref2)

    print("KERNEL_OK")
</pallas_src>

<mosaic_0001>
module attributes {stable_mosaic.version = 11 : i64} {
  func.func @_general_kernel(%arg0: i32, %arg1: i32, %arg2: memref<4x16xf32, #tpu.memory_space<vmem>>, %arg3: memref<4x1xf32, #tpu.memory_space<vmem>>, %arg4: memref<2x4x16xbf16, #tpu.memory_space<vmem>>, %arg5: memref<8xf32, #tpu.memory_space<smem>>, %arg6: memref<4x1xf32, #tpu.memory_space<vmem>>, %arg7: memref<2x4x1xf32, #tpu.memory_space<vmem>>, %arg8: memref<2x4x1xf32, #tpu.memory_space<vmem>>, %arg9: memref<2x4x1xf32, #tpu.memory_space<vmem>>) attributes {dimension_semantics = [#tpu.dimension_semantics<parallel>, #tpu.dimension_semantics<arbitrary>], iteration_bounds = array<i64: 1, 1>, scalar_prefetch = 0 : i64, scratch_operands = 3 : i64, tpu.core_type = #tpu.core_type<tc>, window_params = [{transform_indices = @transform_0, window_bounds = array<i64: 4, 16>}, {transform_indices = @transform_1, window_bounds = array<i64: 4, 1>}, {transform_indices = @transform_2, window_bounds = array<i64: 2, 4, 16>}, {transform_indices = @transform_3, window_bounds = array<i64: 8>}, {transform_indices = @transform_4, window_bounds = array<i64: 4, 1>}]} {
    %c0_i32 = arith.constant 0 : i32
    %0 = arith.cmpi eq, %arg1, %c0_i32 : i32
    %1 = arith.extui %0 : i1 to i32
    %c0_i32_0 = arith.constant 0 : i32
    %2 = arith.cmpi ne, %1, %c0_i32_0 : i32
    scf.if %2 {
      %cst_50 = arith.constant 0.000000e+00 : f32
      %66 = vector.broadcast %cst_50 : f32 to vector<2x4x1xf32>
      %c0_51 = arith.constant 0 : index
      %c0_52 = arith.constant 0 : index
      %c0_53 = arith.constant 0 : index
      %67 = vector.load %arg7[%c0_51, %c0_52, %c0_53] : memref<2x4x1xf32, #tpu.memory_space<vmem>>, vector<2x4x1xf32>
      tpu.vector_store %arg7[%c0_51, %c0_52, %c0_53], %66 {strides = array<i32>} : memref<2x4x1xf32, #tpu.memory_space<vmem>>, vector<2x4x1xf32>,
      %cst_54 = arith.constant 0.000000e+00 : f32
      %68 = vector.broadcast %cst_54 : f32 to vector<2x4x1xf32>
      %c0_55 = arith.constant 0 : index
      %c0_56 = arith.constant 0 : index
      %c0_57 = arith.constant 0 : index
      %69 = vector.load %arg8[%c0_55, %c0_56, %c0_57] : memref<2x4x1xf32, #tpu.memory_space<vmem>>, vector<2x4x1xf32>
      tpu.vector_store %arg8[%c0_55, %c0_56, %c0_57], %68 {strides = array<i32>} : memref<2x4x1xf32, #tpu.memory_space<vmem>>, vector<2x4x1xf32>,
      %cst_58 = arith.constant 0.000000e+00 : f32
      %70 = vector.broadcast %cst_58 : f32 to vector<2x4x1xf32>
      %c0_59 = arith.constant 0 : index
      %c0_60 = arith.constant 0 : index
      %c0_61 = arith.constant 0 : index
      %71 = vector.load %arg9[%c0_59, %c0_60, %c0_61] : memref<2x4x1xf32, #tpu.memory_space<vmem>>, vector<2x4x1xf32>
      tpu.vector_store %arg9[%c0_59, %c0_60, %c0_61], %70 {strides = array<i32>} : memref<2x4x1xf32, #tpu.memory_space<vmem>>, vector<2x4x1xf32>,
    } else {
    }
    %c0 = arith.constant 0 : index
    %c0_1 = arith.constant 0 : index
    %3 = vector.load %arg2[%c0, %c0_1] : memref<4x16xf32, #tpu.memory_space<vmem>>, vector<4x16xf32>
    %4 = arith.mulf %3, %3 : vector<4x16xf32>
    %c0_2 = arith.constant 0 : index
    %c0_3 = arith.constant 0 : index
    %c0_4 = arith.constant 0 : index
    %5 = vector.load %arg4[%c0_2, %c0_3, %c0_4] : memref<2x4x16xbf16, #tpu.memory_space<vmem>>, vector<1x4x16xbf16>
    %6 = vector.shape_cast %5 : vector<1x4x16xbf16> to vector<4x16xbf16>
    %7 = arith.extf %6 : vector<4x16xbf16> to vector<4x16xf32>
    %c0_5 = arith.constant 0 : index
    %c0_6 = arith.constant 0 : index
    %c0_7 = arith.constant 0 : index
    %8 = vector.load %arg7[%c0_5, %c0_6, %c0_7] : memref<2x4x1xf32, #tpu.memory_space<vmem>>, vector<1x4x1xf32>
    %9 = vector.shape_cast %8 : vector<1x4x1xf32> to vector<4x1xf32>
    %10 = arith.mulf %3, %7 : vector<4x16xf32>
    %cst = arith.constant dense<0.000000e+00> : vector<4xf32>
    %11 = vector.multi_reduction <add>, %10, %cst [1] : vector<4x16xf32> to vector<4xf32>
    %12 = vector.shape_cast %11 : vector<4xf32> to vector<4x1xf32>
    %13 = arith.addf %9, %12 : vector<4x1xf32>
    %c0_8 = arith.constant 0 : index
    %c0_9 = arith.constant 0 : index
    %c0_10 = arith.constant 0 : index
    %14 = vector.load %arg7[%c0_8, %c0_9, %c0_10] : memref<2x4x1xf32, #tpu.memory_space<vmem>>, vector<1x4x1xf32>
    %15 = vector.shape_cast %14 : vector<1x4x1xf32> to vector<4x1xf32>
    %16 = vector.shape_cast %13 : vector<4x1xf32> to vector<1x4x1xf32>
    tpu.vector_store %arg7[%c0_8, %c0_9, %c0_10], %16 {strides = array<i32>} : memref<2x4x1xf32, #tpu.memory_space<vmem>>, vector<1x4x1xf32>,
    %c0_11 = arith.constant 0 : index
    %c0_12 = arith.constant 0 : index
    %c0_13 = arith.constant 0 : index
    %17 = vector.load %arg8[%c0_11, %c0_12, %c0_13] : memref<2x4x1xf32, #tpu.memory_space<vmem>>, vector<1x4x1xf32>
    %18 = vector.shape_cast %17 : vector<1x4x1xf32> to vector<4x1xf32>
    %19 = arith.mulf %4, %7 : vector<4x16xf32>
    %cst_14 = arith.constant dense<0.000000e+00> : vector<4xf32>
    %20 = vector.multi_reduction <add>, %19, %cst_14 [1] : vector<4x16xf32> to vector<4xf32>
    %21 = vector.shape_cast %20 : vector<4xf32> to vector<4x1xf32>
    %22 = arith.addf %18, %21 : vector<4x1xf32>
    %c0_15 = arith.constant 0 : index
    %c0_16 = arith.constant 0 : index
    %c0_17 = arith.constant 0 : index
    %23 = vector.load %arg8[%c0_15, %c0_16, %c0_17] : memref<2x4x1xf32, #tpu.memory_space<vmem>>, vector<1x4x1xf32>
    %24 = vector.shape_cast %23 : vector<1x4x1xf32> to vector<4x1xf32>
    %25 = vector.shape_cast %22 : vector<4x1xf32> to vector<1x4x1xf32>
    tpu.vector_store %arg8[%c0_15, %c0_16, %c0_17], %25 {strides = array<i32>} : memref<2x4x1xf32, #tpu.memory_space<vmem>>, vector<1x4x1xf32>,
    %c0_18 = arith.constant 0 : index
    %c0_19 = arith.constant 0 : index
    %c0_20 = arith.constant 0 : index
    %26 = vector.load %arg9[%c0_18, %c0_19, %c0_20] : memref<2x4x1xf32, #tpu.memory_space<vmem>>, vector<1x4x1xf32>
    %27 = vector.shape_cast %26 : vector<1x4x1xf32> to vector<4x1xf32>
    %cst_21 = arith.constant dense<0.000000e+00> : vector<4xf32>
    %28 = vector.multi_reduction <add>, %7, %cst_21 [1] : vector<4x16xf32> to vector<4xf32>
    %29 = vector.shape_cast %28 : vector<4xf32> to vector<4x1xf32>
    %30 = arith.addf %27, %29 : vector<4x1xf32>
    %c0_22 = arith.constant 0 : index
    %c0_23 = arith.constant 0 : index
    %c0_24 = arith.constant 0 : index
    %31 = vector.load %arg9[%c0_22, %c0_23, %c0_24] : memref<2x4x1xf32, #tpu.memory_space<vmem>>, vector<1x4x1xf32>
    %32 = vector.shape_cast %31 : vector<1x4x1xf32> to vector<4x1xf32>
    %33 = vector.shape_cast %30 : vector<4x1xf32> to vector<1x4x1xf32>
    tpu.vector_store %arg9[%c0_22, %c0_23, %c0_24], %33 {strides = array<i32>} : memref<2x4x1xf32, #tpu.memory_space<vmem>>, vector<1x4x1xf32>,
    %c1 = arith.constant 1 : index
    %c0_25 = arith.constant 0 : index
    %c0_26 = arith.constant 0 : index
    %34 = vector.load %arg4[%c1, %c0_25, %c0_26] : memref<2x4x16xbf16, #tpu.memory_space<vmem>>, vector<1x4x16xbf16>
    %35 = vector.shape_cast %34 : vector<1x4x16xbf16> to vector<4x16xbf16>
    %36 = arith.extf %35 : vector<4x16xbf16> to vector<4x16xf32>
    %c1_27 = arith.constant 1 : index
    %c0_28 = arith.constant 0 : index
    %c0_29 = arith.constant 0 : index
    %37 = vector.load %arg7[%c1_27, %c0_28, %c0_29] : memref<2x4x1xf32, #tpu.memory_space<vmem>>, vector<1x4x1xf32>
    %38 = vector.shape_cast %37 : vector<1x4x1xf32> to vector<4x1xf32>
    %39 = arith.mulf %3, %36 : vector<4x16xf32>
    %cst_30 = arith.constant dense<0.000000e+00> : vector<4xf32>
    %40 = vector.multi_reduction <add>, %39, %cst_30 [1] : vector<4x16xf32> to vector<4xf32>
    %41 = vector.shape_cast %40 : vector<4xf32> to vector<4x1xf32>
    %42 = arith.addf %38, %41 : vector<4x1xf32>
    %c1_31 = arith.constant 1 : index
    %c0_32 = arith.constant 0 : index
    %c0_33 = arith.constant 0 : index
    %43 = vector.load %arg7[%c1_31, %c0_32, %c0_33] : memref<2x4x1xf32, #tpu.memory_space<vmem>>, vector<1x4x1xf32>
    %44 = vector.shape_cast %43 : vector<1x4x1xf32> to vector<4x1xf32>
    %45 = vector.shape_cast %42 : vector<4x1xf32> to vector<1x4x1xf32>
    tpu.vector_store %arg7[%c1_31, %c0_32, %c0_33], %45 {strides = array<i32>} : memref<2x4x1xf32, #tpu.memory_space<vmem>>, vector<1x4x1xf32>,
    %c1_34 = arith.constant 1 : index
    %c0_35 = arith.constant 0 : index
    %c0_36 = arith.constant 0 : index
    %46 = vector.load %arg8[%c1_34, %c0_35, %c0_36] : memref<2x4x1xf32, #tpu.memory_space<vmem>>, vector<1x4x1xf32>
    %47 = vector.shape_cast %46 : vector<1x4x1xf32> to vector<4x1xf32>
    %48 = arith.mulf %4, %36 : vector<4x16xf32>
    %cst_37 = arith.constant dense<0.000000e+00> : vector<4xf32>
    %49 = vector.multi_reduction <add>, %48, %cst_37 [1] : vector<4x16xf32> to vector<4xf32>
    %50 = vector.shape_cast %49 : vector<4xf32> to vector<4x1xf32>
    %51 = arith.addf %47, %50 : vector<4x1xf32>
    %c1_38 = arith.constant 1 : index
    %c0_39 = arith.constant 0 : index
    %c0_40 = arith.constant 0 : index
    %52 = vector.load %arg8[%c1_38, %c0_39, %c0_40] : memref<2x4x1xf32, #tpu.memory_space<vmem>>, vector<1x4x1xf32>
    %53 = vector.shape_cast %52 : vector<1x4x1xf32> to vector<4x1xf32>
    %54 = vector.shape_cast %51 : vector<4x1xf32> to vector<1x4x1xf32>
    tpu.vector_store %arg8[%c1_38, %c0_39, %c0_40], %54 {strides = array<i32>} : memref<2x4x1xf32, #tpu.memory_space<vmem>>, vector<1x4x1xf32>,
    %c1_41 = arith.constant 1 : index
    %c0_42 = arith.constant 0 : index
    %c0_43 = arith.constant 0 : index
    %55 = vector.load %arg9[%c1_41, %c0_42, %c0_43] : memref<2x4x1xf32, #tpu.memory_space<vmem>>, vector<1x4x1xf32>
    %56 = vector.shape_cast %55 : vector<1x4x1xf32> to vector<4x1xf32>
    %cst_44 = arith.constant dense<0.000000e+00> : vector<4xf32>
    %57 = vector.multi_reduction <add>, %36, %cst_44 [1] : vector<4x16xf32> to vector<4xf32>
    %58 = vector.shape_cast %57 : vector<4xf32> to vector<4x1xf32>
    %59 = arith.addf %56, %58 : vector<4x1xf32>
    %c1_45 = arith.constant 1 : index
    %c0_46 = arith.constant 0 : index
    %c0_47 = arith.constant 0 : index
    %60 = vector.load %arg9[%c1_45, %c0_46, %c0_47] : memref<2x4x1xf32, #tpu.memory_space<vmem>>, vector<1x4x1xf32>
    %61 = vector.shape_cast %60 : vector<1x4x1xf32> to vector<4x1xf32>
    %62 = vector.shape_cast %59 : vector<4x1xf32> to vector<1x4x1xf32>
    tpu.vector_store %arg9[%c1_45, %c0_46, %c0_47], %62 {strides = array<i32>} : memref<2x4x1xf32, #tpu.memory_space<vmem>>, vector<1x4x1xf32>,
    %c0_i32_48 = arith.constant 0 : i32
    %63 = arith.cmpi eq, %arg1, %c0_i32_48 : i32
    %64 = arith.extui %63 : i1 to i32
    %c0_i32_49 = arith.constant 0 : i32
    %65 = arith.cmpi ne, %64, %c0_i32_49 : i32
    scf.if %65 {
      %c0_50 = arith.constant 0 : index
      %c0_51 = arith.constant 0 : index
      %66 = vector.load %arg3[%c0_50, %c0_51] : memref<4x1xf32, #tpu.memory_space<vmem>>, vector<4x1xf32>
      %c0_52 = arith.constant 0 : index
      %67 = memref.load %arg5[%c0_52] : memref<8xf32, #tpu.memory_space<smem>>
      %c1_53 = arith.constant 1 : index
      %68 = memref.load %arg5[%c1_53] : memref<8xf32, #tpu.memory_space<smem>>
      %c2 = arith.constant 2 : index
      %69 = memref.load %arg5[%c2] : memref<8xf32, #tpu.memory_space<smem>>
      %c3 = arith.constant 3 : index
      %70 = memref.load %arg5[%c3] : memref<8xf32, #tpu.memory_space<smem>>
      %c0_54 = arith.constant 0 : index
      %c0_55 = arith.constant 0 : index
      %c0_56 = arith.constant 0 : index
      %71 = vector.load %arg7[%c0_54, %c0_55, %c0_56] : memref<2x4x1xf32, #tpu.memory_space<vmem>>, vector<1x4x1xf32>
      %72 = vector.shape_cast %71 : vector<1x4x1xf32> to vector<4x1xf32>
      %73 = arith.mulf %72, %72 : vector<4x1xf32>
      %c0_57 = arith.constant 0 : index
      %c0_58 = arith.constant 0 : index
      %c0_59 = arith.constant 0 : index
      %74 = vector.load %arg9[%c0_57, %c0_58, %c0_59] : memref<2x4x1xf32, #tpu.memory_space<vmem>>, vector<1x4x1xf32>
      %75 = vector.shape_cast %74 : vector<1x4x1xf32> to vector<4x1xf32>
      %76 = arith.mulf %73, %75 : vector<4x1xf32>
      %c0_60 = arith.constant 0 : index
      %c0_61 = arith.constant 0 : index
      %c0_62 = arith.constant 0 : index
      %77 = vector.load %arg8[%c0_60, %c0_61, %c0_62] : memref<2x4x1xf32, #tpu.memory_space<vmem>>, vector<1x4x1xf32>
      %78 = vector.shape_cast %77 : vector<1x4x1xf32> to vector<4x1xf32>
      %79 = vector.broadcast %67 : f32 to vector<4x1xf32>
      %80 = arith.mulf %78, %79 : vector<4x1xf32>
      %81 = vector.broadcast %68 : f32 to vector<4x1xf32>
      %82 = arith.mulf %73, %81 : vector<4x1xf32>
      %83 = arith.addf %80, %82 : vector<4x1xf32>
      %84 = vector.broadcast %69 : f32 to vector<4x1xf32>
      %85 = arith.mulf %76, %84 : vector<4x1xf32>
      %86 = arith.addf %83, %85 : vector<4x1xf32>
      %87 = vector.broadcast %70 : f32 to vector<4x1xf32>
      %88 = arith.addf %86, %87 : vector<4x1xf32>
      %89 = arith.subf %66, %88 : vector<4x1xf32>
      %c4 = arith.constant 4 : index
      %90 = memref.load %arg5[%c4] : memref<8xf32, #tpu.memory_space<smem>>
      %c5 = arith.constant 5 : index
      %91 = memref.load %arg5[%c5] : memref<8xf32, #tpu.memory_space<smem>>
      %c6 = arith.constant 6 : index
      %92 = memref.load %arg5[%c6] : memref<8xf32, #tpu.memory_space<smem>>
      %c7 = arith.constant 7 : index
      %93 = memref.load %arg5[%c7] : memref<8xf32, #tpu.memory_space<smem>>
      %c1_63 = arith.constant 1 : index
      %c0_64 = arith.constant 0 : index
      %c0_65 = arith.constant 0 : index
      %94 = vector.load %arg7[%c1_63, %c0_64, %c0_65] : memref<2x4x1xf32, #tpu.memory_space<vmem>>, vector<1x4x1xf32>
      %95 = vector.shape_cast %94 : vector<1x4x1xf32> to vector<4x1xf32>
      %96 = arith.mulf %95, %95 : vector<4x1xf32>
      %c1_66 = arith.constant 1 : index
      %c0_67 = arith.constant 0 : index
      %c0_68 = arith.constant 0 : index
      %97 = vector.load %arg9[%c1_66, %c0_67, %c0_68] : memref<2x4x1xf32, #tpu.memory_space<vmem>>, vector<1x4x1xf32>
      %98 = vector.shape_cast %97 : vector<1x4x1xf32> to vector<4x1xf32>
      %99 = arith.mulf %96, %98 : vector<4x1xf32>
      %c1_69 = arith.constant 1 : index
      %c0_70 = arith.constant 0 : index
      %c0_71 = arith.constant 0 : index
      %100 = vector.load %arg8[%c1_69, %c0_70, %c0_71] : memref<2x4x1xf32, #tpu.memory_space<vmem>>, vector<1x4x1xf32>
      %101 = vector.shape_cast %100 : vector<1x4x1xf32> to vector<4x1xf32>
      %102 = vector.broadcast %90 : f32 to vector<4x1xf32>
      %103 = arith.mulf %101, %102 : vector<4x1xf32>
      %104 = vector.broadcast %91 : f32 to vector<4x1xf32>
      %105 = arith.mulf %96, %104 : vector<4x1xf32>
      %106 = arith.addf %103, %105 : vector<4x1xf32>
      %107 = vector.broadcast %92 : f32 to vector<4x1xf32>
      %108 = arith.mulf %99, %107 : vector<4x1xf32>
      %109 = arith.addf %106, %108 : vector<4x1xf32>
      %110 = vector.broadcast %93 : f32 to vector<4x1xf32>
      %111 = arith.addf %109, %110 : vector<4x1xf32>
      %112 = arith.subf %89, %111 : vector<4x1xf32>
      %c0_72 = arith.constant 0 : index
      %c0_73 = arith.constant 0 : index
      %113 = vector.load %arg6[%c0_72, %c0_73] : memref<4x1xf32, #tpu.memory_space<vmem>>, vector<4x1xf32>
      tpu.vector_store %arg6[%c0_72, %c0_73], %112 {strides = array<i32>} : memref<4x1xf32, #tpu.memory_space<vmem>>, vector<4x1xf32>,
    } else {
    }
    return
  }
  func.func @transform_0(%arg0: i32, %arg1: i32) -> (i32, i32) {
    %c0_i32 = arith.constant 0 : i32
    return %arg0, %arg1 : i32, i32
  }
  func.func @transform_1(%arg0: i32, %arg1: i32) -> (i32, i32) {
    %c0_i32 = arith.constant 0 : i32
    %c0_i32_0 = arith.constant 0 : i32
    return %arg0, %c0_i32 : i32, i32
  }
  func.func @transform_2(%arg0: i32, %arg1: i32) -> (i32, i32, i32) {
    %c0_i32 = arith.constant 0 : i32
    %c0_i32_0 = arith.constant 0 : i32
    return %c0_i32, %arg0, %arg1 : i32, i32, i32
  }
  func.func @transform_3(%arg0: i32, %arg1: i32) -> i32 {
    %c0_i32 = arith.constant 0 : i32
    %c0_i32_0 = arith.constant 0 : i32
    return %c0_i32 : i32
  }
  func.func @transform_4(%arg0: i32, %arg1: i32) -> (i32, i32) {
    %c0_i32 = arith.constant 0 : i32
    %c0_i32_0 = arith.constant 0 : i32
    return %arg0, %c0_i32 : i32, i32
  }
}

</mosaic_0001>

<llo_original>
// kernel: tpu_custom_call.1
$region0: #{tpu_custom_call.1}
  #allocation0 [shape = 'u32[]', space=smem, size = 0x4, offset = 0x4, fixed_abs, tag = 'smem constant byte address 0x4 - core index']
  #allocation1 [shape = 'u32[144,128]{1,0:T(1,128)}', space=vmem, size = 0x12000, scoped, tag = 'internal scratch']
  #allocation2 [shape = 'f32[2,4,1]{2,1,0:T(4,128)}', space=vmem, size = 0x1000, scoped, tag = 'scratch operand']
  #allocation3 [shape = 'f32[2,4,1]{2,1,0:T(4,128)}', space=vmem, size = 0x1000, scoped, tag = 'scratch operand']
  #allocation4 [shape = 'f32[2,4,1]{2,1,0:T(4,128)}', space=vmem, size = 0x1000, scoped, tag = 'scratch operand']
  %s0 = inlined_call_operand.vmem [shape: f32[4,16], index: 0, kind: input, shape index: {}]
  %s1 = inlined_call_operand.vmem [shape: f32[4,1], index: 1, kind: input, shape index: {}]
  %s2 = inlined_call_operand.vmem [shape: bf16[2,4,16], index: 2, kind: input, shape index: {}]
  %s3 = inlined_call_operand.vmem [shape: f32[8], index: 3, kind: input, shape index: {}]
  %s4 = inlined_call_operand.vmem [shape: f32[4,1], index: 4, kind: output, shape index: {}]
  %s5 = sld [smem:[#allocation0]]
  $region38: #{tpu_custom_call.1} parent=0
    _
  %s7 = ssub.s32 1, %s5
  %s8 = scalar_select 0, %s7, %s5
  $region1: #{tpu_custom_call.1} parent=0
    #allocation5 [shape = 'u8[512]{0}', space=smem, size = 0x200, scoped, tag = 'input window, operand 3, single buffered']
    #allocation6 [shape = 's32[1]{0}', space=sflag, size = 0x4, scoped, tag = 'scoped memory for tpu_custom_call.1']
    %9 = vsyncpa [#allocation6], 0
    // Predicated region
    $region2: #{tpu_custom_call.1} parent=1 // pred_check
      _
    $region3: #{tpu_custom_call.1} parent=1 // pred_check_branch
      %11 = sbr.rel (0) target = $region5
    $region4: #{tpu_custom_call.1} parent=1 // pred_region
      _
    $region5: #{tpu_custom_call.1} parent=1 // pred_fallthru
      _
    // Predicated region
    $region6: #{tpu_custom_call.1} parent=1 // pred_check
      _
    $region7: #{tpu_custom_call.1} parent=1 // pred_check_branch
      %13 = sbr.rel (0) target = $region9
    $region8: #{tpu_custom_call.1} parent=1 // pred_region
      _
    $region9: #{tpu_custom_call.1} parent=1 // pred_fallthru
      _
    // Predicated region
    $region10: #{tpu_custom_call.1} parent=1 // pred_check
      _
    $region11: #{tpu_custom_call.1} parent=1 // pred_check_branch
      %15 = sbr.rel (0) target = $region13
    $region12: #{tpu_custom_call.1} parent=1 // pred_region
      _
    $region13: #{tpu_custom_call.1} parent=1 // pred_fallthru
      _
    // Predicated region
    $region14: #{tpu_custom_call.1} parent=1 // pred_check
      _
    $region15: #{tpu_custom_call.1} parent=1 // pred_check_branch
      %17 = sbr.rel (0) target = $region17
    $region16: #{tpu_custom_call.1} parent=1 // pred_region
      %s19 = ssub.s32 16, 16
      %20 = vsyncadd [#allocation6], %s19
      %s22 = sshll.u32 %s3, 4
      %s23 = int_to_ptr.vmem [resolvable:$true] %s22
      %25 = dma.vmem_to_smem %s23, 16, [#allocation5], [#allocation6]
    $region17: #{tpu_custom_call.1} parent=1 // pred_fallthru
      _
    // Predicated region
    $region18: #{tpu_custom_call.1} parent=1 // pred_check
      _
    $region19: #{tpu_custom_call.1} parent=1 // pred_check_branch
      %27 = sbr.rel (0) target = $region21
    $region20: #{tpu_custom_call.1} parent=1 // pred_region
      %28 = dma.done [#allocation6], 16
    $region21: #{tpu_custom_call.1} parent=1 // pred_fallthru
      _
    %29 = sfence
    %p30 = scmp.eq.s32.totalorder 0, 0
    // Predicated region
    $region22: #{tpu_custom_call.1} parent=1 // pred_check
      %p31 = pneg %p30
    $region23: #{tpu_custom_call.1} parent=1 // pred_check_branch
      %33 = sbr.rel (%p31) target = $region25
    $region24: #{tpu_custom_call.1} parent=1 // pred_region
      %vm34 = vcmask 3072
      %35 = vst.msk [vmem:[#allocation2] sm:$0xf] %vm34, 0.0
      %36 = vst.msk [vmem:[#allocation2 + $0x4] sm:$0xf] %vm34, 0.0
      %37 = vst.msk [vmem:[#allocation3] sm:$0xf] %vm34, 0.0
      %38 = vst.msk [vmem:[#allocation3 + $0x4] sm:$0xf] %vm34, 0.0
      %39 = vst.msk [vmem:[#allocation4] sm:$0xf] %vm34, 0.0
      %40 = vst.msk [vmem:[#allocation4 + $0x4] sm:$0xf] %vm34, 0.0
    $region25: #{tpu_custom_call.1} parent=1 // pred_fallthru
      _
    %v41 = vld [vmem:[%s0] sm:$0xf]
    %v42 = vmul.f32 %v41, %v41
    %v43 = vld [vmem:[%s2] sm:$0x3]
    %v44 = vunpack.c.l.bf16 %v43
    %v45 = vld [vmem:[#allocation2] sm:$0xf]
    %v46 = vmul.f32 %v41, %v44
    %vm47 = vcmask 125952
    %v48 = vsel %vm47, %v46, 0.0
    %49 = vadd.xlane.f32.xlu0 %v48
    %v50 = vpop.xlane.xlu0 %49
    %v51 = vadd.f32 %v45, %v50
    %vm52 = vcmask 3072
    %53 = vst.msk [vmem:[#allocation2] sm:$0xf] %vm52, %v51
    %v54 = vld [vmem:[#allocation3] sm:$0xf]
    %v55 = vmul.f32 %v42, %v44
    %v56 = vsel %vm47, %v55, 0.0
    %57 = vadd.xlane.f32.xlu0 %v56
    %v58 = vpop.xlane.xlu0 %57
    %v59 = vadd.f32 %v54, %v58
    %60 = vst.msk [vmem:[#allocation3] sm:$0xf] %vm52, %v59
    %v61 = vld [vmem:[#allocation4] sm:$0xf]
    %v62 = vsel %vm47, %v44, 0.0
    %63 = vadd.xlane.f32.xlu0 %v62
    %v64 = vpop.xlane.xlu0 %63
    %v65 = vadd.f32 %v61, %v64
    %66 = vst.msk [vmem:[#allocation4] sm:$0xf] %vm52, %v65
    %s67 = scalar_lea.vmem %s2, 2
    %v68 = vld [vmem:[%s67] sm:$0x3]
    %v69 = vunpack.c.l.bf16 %v68
    %s70 = scalar_lea.vmem [#allocation2], 4
    %v71 = vld [vmem:[%s70] sm:$0xf]
    %v72 = vmul.f32 %v41, %v69
    %v73 = vsel %vm47, %v72, 0.0
    %74 = vadd.xlane.f32.xlu0 %v73
    %v75 = vpop.xlane.xlu0 %74
    %v76 = vadd.f32 %v71, %v75
    %77 = vst.msk [vmem:[%s70] sm:$0xf] %vm52, %v76
    %s78 = scalar_lea.vmem [#allocation3], 4
    %v79 = vld [vmem:[%s78] sm:$0xf]
    %v80 = vmul.f32 %v42, %v69
    %v81 = vsel %vm47, %v80, 0.0
    %82 = vadd.xlane.f32.xlu0 %v81
    %v83 = vpop.xlane.xlu0 %82
    %v84 = vadd.f32 %v79, %v83
    %85 = vst.msk [vmem:[%s78] sm:$0xf] %vm52, %v84
    %s86 = scalar_lea.vmem [#allocation4], 4
    %v87 = vld [vmem:[%s86] sm:$0xf]
    %v88 = vsel %vm47, %v69, 0.0
    %89 = vadd.xlane.f32.xlu0 %v88
    %v90 = vpop.xlane.xlu0 %89
    %v91 = vadd.f32 %v87, %v90
    %92 = vst.msk [vmem:[%s86] sm:$0xf] %vm52, %v91
    // Predicated region
    $region26: #{tpu_custom_call.1} parent=1 // pred_check
      %p93 = pneg %p30
    $region27: #{tpu_custom_call.1} parent=1 // pred_check_branch
      %95 = sbr.rel (%p93) target = $region29
    $region28: #{tpu_custom_call.1} parent=1 // pred_region
      %v96 = vld [vmem:[%s1] sm:$0xf]
      %s97 = sld [smem:[#allocation5]]
      %s98 = sld [smem:[#allocation5 + $0x1]]
      %s99 = sld [smem:[#allocation5 + $0x2]]
      %s100 = sld [smem:[#allocation5 + $0x3]]
      %v101 = vld [vmem:[#allocation2] sm:$0xf]
      %v102 = vmul.f32 %v101, %v101
      %v103 = vld [vmem:[#allocation4] sm:$0xf]
      %v104 = vmul.f32 %v102, %v103
      %v105 = vld [vmem:[#allocation3] sm:$0xf]
      %v106 = vstv %s97
      %v107 = vmul.f32 %v105, %v106
      %v108 = vstv %s98
      %v109 = vmul.f32 %v102, %v108
      %v110 = vadd.f32 %v107, %v109
      %v111 = vstv %s99
      %v112 = vmul.f32 %v104, %v111
      %v113 = vadd.f32 %v110, %v112
      %v114 = vstv %s100
      %v115 = vadd.f32 %v113, %v114
      %v116 = vsub.f32 %v96, %v115
      %s117 = sld [smem:[#allocation5 + $0x4]]
      %s118 = sld [smem:[#allocation5 + $0x5]]
      %s119 = sld [smem:[#allocation5 + $0x6]]
      %s120 = sld [smem:[#allocation5 + $0x7]]
      %v121 = vld [vmem:[%s70] sm:$0xf]
      %v122 = vmul.f32 %v121, %v121
      %v123 = vld [vmem:[%s86] sm:$0xf]
      %v124 = vmul.f32 %v122, %v123
      %v125 = vld [vmem:[%s78] sm:$0xf]
      %v126 = vstv %s117
      %v127 = vmul.f32 %v125, %v126
      %v128 = vstv %s118
      %v129 = vmul.f32 %v122, %v128
      %v130 = vadd.f32 %v127, %v129
      %v131 = vstv %s119
      %v132 = vmul.f32 %v124, %v131
      %v133 = vadd.f32 %v130, %v132
      %v134 = vstv %s120
      %v135 = vadd.f32 %v133, %v134
      %v136 = vsub.f32 %v116, %v135
      %137 = vst.msk [vmem:[%s4] sm:$0xf] %vm52, %v136
    $region29: #{tpu_custom_call.1} parent=1 // pred_fallthru
      _
    // Predicated region
    $region30: #{tpu_custom_call.1} parent=1 // pred_check
      _
    $region31: #{tpu_custom_call.1} parent=1 // pred_check_branch
      %139 = sbr.rel (0) target = $region33
    $region32: #{tpu_custom_call.1} parent=1 // pred_region
      _
    $region33: #{tpu_custom_call.1} parent=1 // pred_fallthru
      _
    // Predicated region
    $region34: #{tpu_custom_call.1} parent=1 // pred_check
      _
    $region35: #{tpu_custom_call.1} parent=1 // pred_check_branch
      %141 = sbr.rel (0) target = $region37
    $region36: #{tpu_custom_call.1} parent=1 // pred_region
      _
    $region37: #{tpu_custom_call.1} parent=1 // pred_fallthru
      _
    %142 = vsyncpa [#allocation6], 1

</llo_original>
